<compile_context>
chip_gen: v7x
topology: tpu7x:2x2x1
jax: 0.10.0
libtpu: 0.0.40
codegen_flags: <defaults>
</compile_context>

<pallas_src>
import functools

import numpy as np
import jax
import jax.numpy as jnp
from jax.experimental import pallas as pl
from jax.experimental.pallas import tpu as pltpu


def _round_up(n, m):
    return ((n + m - 1) // m) * m


def _pre_solu_kernel(x_ref, w1_ref, b1_ref, w2_ref, b2_ref, m_ref, o_ref, *, W, HW):
    """One batch element per grid step.

    x_ref : (Cin_p, HW)        input image, channels on sublanes, flat H*W on lanes
    w1_ref: (Cout_p, 9*Cin_p)  conv1 weights, k = (dy*3 + dx)*Cin_p + ci
    b1_ref: (Cout_p, 1)
    w2_ref: (Cout_p, 9*Cout_p) conv2 weights, same k ordering
    b2_ref: (Cout_p, 1)
    m_ref : (9, HW)            1.0 where tap (dy,dx) is in-bounds, else 0.0
    o_ref : (Cout_p, HW)
    """

    def im2col(feat):
        # feat: (C, HW) -> (9*C, HW); taps ordered dy-major, then dx, then channel.
        cols = []
        t = 0
        for dy in range(3):
            for dx in range(3):
                off = (dy - 1) * W + (dx - 1)
                if off == 0:
                    cols.append(feat)                      # center tap, mask is all-ones
                else:
                    shifted = pltpu.roll(feat, shift=(-off) % HW, axis=1)
                    cols.append(shifted * m_ref[t:t + 1, :])
                t += 1
        return jnp.concatenate(cols, axis=0)

    # conv1 (3x3, s1, p1) + ReLU: a single (Cout_p, 9*Cin_p) @ (9*Cin_p, HW) matmul.
    y1 = jnp.dot(w1_ref[...], im2col(x_ref[...]),
                 preferred_element_type=jnp.float32)
    y1 = jnp.maximum(y1 + b1_ref[...], 0.0)

    # conv2 (3x3, s1, p1): conv1 result stays in registers; no VMEM scratch round trip.
    y2 = jnp.dot(w2_ref[...], im2col(y1),
                 preferred_element_type=jnp.float32)
    o_ref[...] = (y2 + b2_ref[...]).astype(o_ref.dtype)


def _border_masks(H, W):
    """(9, H*W) f32 masks: 1.0 where the shifted tap (dy, dx) is inside the image."""
    rr, cc = np.meshgrid(np.arange(H), np.arange(W), indexing="ij")
    masks = np.zeros((9, H * W), np.float32)
    t = 0
    for dy in range(3):
        for dx in range(3):
            ry, rx = dy - 1, dx - 1
            valid = ((rr + ry >= 0) & (rr + ry < H) &
                     (cc + rx >= 0) & (cc + rx < W))
            masks[t] = valid.astype(np.float32).reshape(-1)
            t += 1
    return masks


@jax.jit
def pre_solu_forward(x_nchw, w1, b1, w2, b2):
    """x_nchw: (B, Cin, H, W) f32; w1/w2 in HWIO. Returns (B, Cout, H, W) f32."""
    B, Cin, H, W = x_nchw.shape
    Cout = w1.shape[-1]
    HW = H * W
    Cin_p = _round_up(Cin, 8)
    Cout_p = _round_up(Cout, 8)

    # Input: NCHW -> (B, Cin_p, H*W). Channel pad only; spatial halo handled by masks.
    x2d = jnp.pad(x_nchw.reshape(B, Cin, HW), ((0, 0), (0, Cin_p - Cin), (0, 0)))

    # Weights: HWIO -> lane-friendly 2-D slabs with k = (dy*3 + dx)*C + ci.
    w1p = jnp.pad(w1, ((0, 0), (0, 0), (0, Cin_p - Cin), (0, Cout_p - Cout)))
    w2p = jnp.pad(w2, ((0, 0), (0, 0), (0, Cout_p - Cout), (0, Cout_p - Cout)))
    w1_2d = jnp.transpose(w1p, (3, 0, 1, 2)).reshape(Cout_p, 9 * Cin_p)
    w2_2d = jnp.transpose(w2p, (3, 0, 1, 2)).reshape(Cout_p, 9 * Cout_p)
    b1_2d = jnp.pad(b1, (0, Cout_p - Cout)).reshape(Cout_p, 1)
    b2_2d = jnp.pad(b2, (0, Cout_p - Cout)).reshape(Cout_p, 1)

    masks = jnp.asarray(_border_masks(H, W))

    kernel = functools.partial(_pre_solu_kernel, W=W, HW=HW)

    out = pl.pallas_call(
        kernel,
        out_shape=jax.ShapeDtypeStruct((B, Cout_p, HW), jnp.float32),
        grid_spec=pltpu.PrefetchScalarGridSpec(
            num_scalar_prefetch=0,
            grid=(B,),
            in_specs=[
                pl.BlockSpec((None, Cin_p, HW), lambda b: (b, 0, 0)),      # x
                pl.BlockSpec((Cout_p, 9 * Cin_p), lambda b: (0, 0)),       # w1 slab
                pl.BlockSpec((Cout_p, 1), lambda b: (0, 0)),               # b1
                pl.BlockSpec((Cout_p, 9 * Cout_p), lambda b: (0, 0)),      # w2 slab
                pl.BlockSpec((Cout_p, 1), lambda b: (0, 0)),               # b2
                pl.BlockSpec((9, HW), lambda b: (0, 0)),                   # border masks
            ],
            out_specs=pl.BlockSpec((None, Cout_p, HW), lambda b: (b, 0, 0)),
        ),
        compiler_params=pltpu.CompilerParams(
            dimension_semantics=("parallel",)),
    )(x2d, w1_2d, b1_2d, w2_2d, b2_2d, masks)

    # (B, Cout_p, H*W) is already channel-major -> NCHW via reshape only.
    return out[:, :Cout, :].reshape(B, Cout, H, W)


def _reference(x_nchw, w1, b1, w2, b2):
    """Plain-JAX reference (lax conv) for validation."""
    dn = ("NCHW", "HWIO", "NCHW")
    y = jax.lax.conv_general_dilated(x_nchw, w1, window_strides=(1, 1),
                                     padding=((1, 1), (1, 1)),
                                     dimension_numbers=dn)
    y = jnp.maximum(y + b1[None, :, None, None], 0.0)
    y = jax.lax.conv_general_dilated(y, w2, window_strides=(1, 1),
                                     padding=((1, 1), (1, 1)),
                                     dimension_numbers=dn)
    return y + b2[None, :, None, None]


if __name__ == "__main__":
    B, Cin, Cout, H, W = 2, 4, 8, 16, 16

    key = jax.random.PRNGKey(0)
    kx, kw1, kb1, kw2, kb2 = jax.random.split(key, 5)

    x = jax.random.normal(kx, (B, Cin, H, W), jnp.float32)

    # Deterministic parameter init (same shapes as nn.Conv2d weights), HWIO layout.
    fan1 = Cin * 3 * 3
    fan2 = Cout * 3 * 3
    w1 = jax.random.uniform(kw1, (3, 3, Cin, Cout), jnp.float32,
                            -1.0 / jnp.sqrt(fan1), 1.0 / jnp.sqrt(fan1))
    b1 = jax.random.uniform(kb1, (Cout,), jnp.float32,
                            -1.0 / jnp.sqrt(fan1), 1.0 / jnp.sqrt(fan1))
    w2 = jax.random.uniform(kw2, (3, 3, Cout, Cout), jnp.float32,
                            -1.0 / jnp.sqrt(fan2), 1.0 / jnp.sqrt(fan2))
    b2 = jax.random.uniform(kb2, (Cout,), jnp.float32,
                            -1.0 / jnp.sqrt(fan2), 1.0 / jnp.sqrt(fan2))

    out = pre_solu_forward(x, w1, b1, w2, b2)
    out = jax.block_until_ready(out)

    ref = _reference(x, w1, b1, w2, b2)
    assert out.shape == (B, Cout, H, W)
    assert jnp.allclose(out, ref, atol=2e-4, rtol=2e-4), "mismatch vs reference"

    print("KERNEL_OK")
</pallas_src>

<mosaic_0001>
module attributes {stable_mosaic.version = 11 : i64} {
  func.func @_pre_solu_kernel(%arg0: i32, %arg1: memref<1x8x256xf32, #tpu.memory_space<vmem>>, %arg2: memref<8x72xf32, #tpu.memory_space<vmem>>, %arg3: memref<8x1xf32, #tpu.memory_space<vmem>>, %arg4: memref<8x72xf32, #tpu.memory_space<vmem>>, %arg5: memref<8x1xf32, #tpu.memory_space<vmem>>, %arg6: memref<9x256xf32, #tpu.memory_space<vmem>>, %arg7: memref<1x8x256xf32, #tpu.memory_space<vmem>>) attributes {dimension_semantics = [#tpu.dimension_semantics<parallel>], iteration_bounds = array<i64: 2>, scalar_prefetch = 0 : i64, scratch_operands = 0 : i64, tpu.core_type = #tpu.core_type<tc>, window_params = [{transform_indices = @transform_0, window_bounds = array<i64: 1, 8, 256>}, {pipeline_mode = #tpu.pipeline_mode<synchronous>, transform_indices = @transform_1, window_bounds = array<i64: 8, 72>}, {pipeline_mode = #tpu.pipeline_mode<synchronous>, transform_indices = @transform_2, window_bounds = array<i64: 8, 1>}, {pipeline_mode = #tpu.pipeline_mode<synchronous>, transform_indices = @transform_3, window_bounds = array<i64: 8, 72>}, {pipeline_mode = #tpu.pipeline_mode<synchronous>, transform_indices = @transform_4, window_bounds = array<i64: 8, 1>}, {pipeline_mode = #tpu.pipeline_mode<synchronous>, transform_indices = @transform_5, window_bounds = array<i64: 9, 256>}, {transform_indices = @transform_6, window_bounds = array<i64: 1, 8, 256>}]} {
    %c0 = arith.constant 0 : index
    %c0_0 = arith.constant 0 : index
    %0 = vector.load %arg2[%c0, %c0_0] : memref<8x72xf32, #tpu.memory_space<vmem>>, vector<8x72xf32>
    %c0_1 = arith.constant 0 : index
    %c0_2 = arith.constant 0 : index
    %c0_3 = arith.constant 0 : index
    %1 = vector.load %arg1[%c0_1, %c0_2, %c0_3] : memref<1x8x256xf32, #tpu.memory_space<vmem>>, vector<1x8x256xf32>
    %2 = vector.shape_cast %1 : vector<1x8x256xf32> to vector<8x256xf32>
    %c17_i32 = arith.constant 17 : i32
    %3 = tpu.dynamic_rotate %2 by %c17_i32 dim 1 : vector<8x256xf32>, i32 -> vector<8x256xf32>
    %c0_4 = arith.constant 0 : index
    %c0_5 = arith.constant 0 : index
    %4 = vector.load %arg6[%c0_4, %c0_5] : memref<9x256xf32, #tpu.memory_space<vmem>>, vector<1x256xf32>
    %5 = vector.broadcast %4 : vector<1x256xf32> to vector<8x256xf32>
    %6 = arith.mulf %3, %5 : vector<8x256xf32>
    %c16_i32 = arith.constant 16 : i32
    %7 = tpu.dynamic_rotate %2 by %c16_i32 dim 1 : vector<8x256xf32>, i32 -> vector<8x256xf32>
    %c1 = arith.constant 1 : index
    %c0_6 = arith.constant 0 : index
    %8 = vector.load %arg6[%c1, %c0_6] : memref<9x256xf32, #tpu.memory_space<vmem>>, vector<1x256xf32>
    %9 = vector.broadcast %8 : vector<1x256xf32> to vector<8x256xf32>
    %10 = arith.mulf %7, %9 : vector<8x256xf32>
    %c15_i32 = arith.constant 15 : i32
    %11 = tpu.dynamic_rotate %2 by %c15_i32 dim 1 : vector<8x256xf32>, i32 -> vector<8x256xf32>
    %c2 = arith.constant 2 : index
    %c0_7 = arith.constant 0 : index
    %12 = vector.load %arg6[%c2, %c0_7] : memref<9x256xf32, #tpu.memory_space<vmem>>, vector<1x256xf32>
    %13 = vector.broadcast %12 : vector<1x256xf32> to vector<8x256xf32>
    %14 = arith.mulf %11, %13 : vector<8x256xf32>
    %c1_i32 = arith.constant 1 : i32
    %15 = tpu.dynamic_rotate %2 by %c1_i32 dim 1 : vector<8x256xf32>, i32 -> vector<8x256xf32>
    %c3 = arith.constant 3 : index
    %c0_8 = arith.constant 0 : index
    %16 = vector.load %arg6[%c3, %c0_8] : memref<9x256xf32, #tpu.memory_space<vmem>>, vector<1x256xf32>
    %17 = vector.broadcast %16 : vector<1x256xf32> to vector<8x256xf32>
    %18 = arith.mulf %15, %17 : vector<8x256xf32>
    %c255_i32 = arith.constant 255 : i32
    %19 = tpu.dynamic_rotate %2 by %c255_i32 dim 1 : vector<8x256xf32>, i32 -> vector<8x256xf32>
    %c5 = arith.constant 5 : index
    %c0_9 = arith.constant 0 : index
    %20 = vector.load %arg6[%c5, %c0_9] : memref<9x256xf32, #tpu.memory_space<vmem>>, vector<1x256xf32>
    %21 = vector.broadcast %20 : vector<1x256xf32> to vector<8x256xf32>
    %22 = arith.mulf %19, %21 : vector<8x256xf32>
    %c241_i32 = arith.constant 241 : i32
    %23 = tpu.dynamic_rotate %2 by %c241_i32 dim 1 : vector<8x256xf32>, i32 -> vector<8x256xf32>
    %c6 = arith.constant 6 : index
    %c0_10 = arith.constant 0 : index
    %24 = vector.load %arg6[%c6, %c0_10] : memref<9x256xf32, #tpu.memory_space<vmem>>, vector<1x256xf32>
    %25 = vector.broadcast %24 : vector<1x256xf32> to vector<8x256xf32>
    %26 = arith.mulf %23, %25 : vector<8x256xf32>
    %c240_i32 = arith.constant 240 : i32
    %27 = tpu.dynamic_rotate %2 by %c240_i32 dim 1 : vector<8x256xf32>, i32 -> vector<8x256xf32>
    %c7 = arith.constant 7 : index
    %c0_11 = arith.constant 0 : index
    %28 = vector.load %arg6[%c7, %c0_11] : memref<9x256xf32, #tpu.memory_space<vmem>>, vector<1x256xf32>
    %29 = vector.broadcast %28 : vector<1x256xf32> to vector<8x256xf32>
    %30 = arith.mulf %27, %29 : vector<8x256xf32>
    %c239_i32 = arith.constant 239 : i32
    %31 = tpu.dynamic_rotate %2 by %c239_i32 dim 1 : vector<8x256xf32>, i32 -> vector<8x256xf32>
    %c8 = arith.constant 8 : index
    %c0_12 = arith.constant 0 : index
    %32 = vector.load %arg6[%c8, %c0_12] : memref<9x256xf32, #tpu.memory_space<vmem>>, vector<1x256xf32>
    %33 = vector.broadcast %32 : vector<1x256xf32> to vector<8x256xf32>
    %34 = arith.mulf %31, %33 : vector<8x256xf32>
    %35 = tpu.concatenate %6, %10, %14, %18, %2, %22, %26, %30, %34 in 0 : vector<8x256xf32>, vector<8x256xf32>, vector<8x256xf32>, vector<8x256xf32>, vector<8x256xf32>, vector<8x256xf32>, vector<8x256xf32>, vector<8x256xf32>, vector<8x256xf32> -> vector<72x256xf32>
    %cst = arith.constant dense<0.000000e+00> : vector<8x256xf32>
    %36 = tpu.matmul %0, %35, %cst {dimension_numbers = #tpu.dot_dimension_numbers<[1], [0], [0], [1], [0, 0, 1, 1], [], []>} : vector<8x72xf32>, vector<72x256xf32>, vector<8x256xf32> -> vector<8x256xf32>
    %c0_13 = arith.constant 0 : index
    %c0_14 = arith.constant 0 : index
    %37 = vector.load %arg3[%c0_13, %c0_14] : memref<8x1xf32, #tpu.memory_space<vmem>>, vector<8x1xf32>
    %38 = vector.broadcast %37 : vector<8x1xf32> to vector<8x256xf32>
    %39 = arith.addf %36, %38 : vector<8x256xf32>
    %cst_15 = arith.constant 0.000000e+00 : f32
    %40 = vector.broadcast %cst_15 : f32 to vector<8x256xf32>
    %41 = arith.maximumf %39, %40 : vector<8x256xf32>
    %c0_16 = arith.constant 0 : index
    %c0_17 = arith.constant 0 : index
    %42 = vector.load %arg4[%c0_16, %c0_17] : memref<8x72xf32, #tpu.memory_space<vmem>>, vector<8x72xf32>
    %c17_i32_18 = arith.constant 17 : i32
    %43 = tpu.dynamic_rotate %41 by %c17_i32_18 dim 1 : vector<8x256xf32>, i32 -> vector<8x256xf32>
    %c0_19 = arith.constant 0 : index
    %c0_20 = arith.constant 0 : index
    %44 = vector.load %arg6[%c0_19, %c0_20] : memref<9x256xf32, #tpu.memory_space<vmem>>, vector<1x256xf32>
    %45 = vector.broadcast %44 : vector<1x256xf32> to vector<8x256xf32>
    %46 = arith.mulf %43, %45 : vector<8x256xf32>
    %c16_i32_21 = arith.constant 16 : i32
    %47 = tpu.dynamic_rotate %41 by %c16_i32_21 dim 1 : vector<8x256xf32>, i32 -> vector<8x256xf32>
    %c1_22 = arith.constant 1 : index
    %c0_23 = arith.constant 0 : index
    %48 = vector.load %arg6[%c1_22, %c0_23] : memref<9x256xf32, #tpu.memory_space<vmem>>, vector<1x256xf32>
    %49 = vector.broadcast %48 : vector<1x256xf32> to vector<8x256xf32>
    %50 = arith.mulf %47, %49 : vector<8x256xf32>
    %c15_i32_24 = arith.constant 15 : i32
    %51 = tpu.dynamic_rotate %41 by %c15_i32_24 dim 1 : vector<8x256xf32>, i32 -> vector<8x256xf32>
    %c2_25 = arith.constant 2 : index
    %c0_26 = arith.constant 0 : index
    %52 = vector.load %arg6[%c2_25, %c0_26] : memref<9x256xf32, #tpu.memory_space<vmem>>, vector<1x256xf32>
    %53 = vector.broadcast %52 : vector<1x256xf32> to vector<8x256xf32>
    %54 = arith.mulf %51, %53 : vector<8x256xf32>
    %c1_i32_27 = arith.constant 1 : i32
    %55 = tpu.dynamic_rotate %41 by %c1_i32_27 dim 1 : vector<8x256xf32>, i32 -> vector<8x256xf32>
    %c3_28 = arith.constant 3 : index
    %c0_29 = arith.constant 0 : index
    %56 = vector.load %arg6[%c3_28, %c0_29] : memref<9x256xf32, #tpu.memory_space<vmem>>, vector<1x256xf32>
    %57 = vector.broadcast %56 : vector<1x256xf32> to vector<8x256xf32>
    %58 = arith.mulf %55, %57 : vector<8x256xf32>
    %c255_i32_30 = arith.constant 255 : i32
    %59 = tpu.dynamic_rotate %41 by %c255_i32_30 dim 1 : vector<8x256xf32>, i32 -> vector<8x256xf32>
    %c5_31 = arith.constant 5 : index
    %c0_32 = arith.constant 0 : index
    %60 = vector.load %arg6[%c5_31, %c0_32] : memref<9x256xf32, #tpu.memory_space<vmem>>, vector<1x256xf32>
    %61 = vector.broadcast %60 : vector<1x256xf32> to vector<8x256xf32>
    %62 = arith.mulf %59, %61 : vector<8x256xf32>
    %c241_i32_33 = arith.constant 241 : i32
    %63 = tpu.dynamic_rotate %41 by %c241_i32_33 dim 1 : vector<8x256xf32>, i32 -> vector<8x256xf32>
    %c6_34 = arith.constant 6 : index
    %c0_35 = arith.constant 0 : index
    %64 = vector.load %arg6[%c6_34, %c0_35] : memref<9x256xf32, #tpu.memory_space<vmem>>, vector<1x256xf32>
    %65 = vector.broadcast %64 : vector<1x256xf32> to vector<8x256xf32>
    %66 = arith.mulf %63, %65 : vector<8x256xf32>
    %c240_i32_36 = arith.constant 240 : i32
    %67 = tpu.dynamic_rotate %41 by %c240_i32_36 dim 1 : vector<8x256xf32>, i32 -> vector<8x256xf32>
    %c7_37 = arith.constant 7 : index
    %c0_38 = arith.constant 0 : index
    %68 = vector.load %arg6[%c7_37, %c0_38] : memref<9x256xf32, #tpu.memory_space<vmem>>, vector<1x256xf32>
    %69 = vector.broadcast %68 : vector<1x256xf32> to vector<8x256xf32>
    %70 = arith.mulf %67, %69 : vector<8x256xf32>
    %c239_i32_39 = arith.constant 239 : i32
    %71 = tpu.dynamic_rotate %41 by %c239_i32_39 dim 1 : vector<8x256xf32>, i32 -> vector<8x256xf32>
    %c8_40 = arith.constant 8 : index
    %c0_41 = arith.constant 0 : index
    %72 = vector.load %arg6[%c8_40, %c0_41] : memref<9x256xf32, #tpu.memory_space<vmem>>, vector<1x256xf32>
    %73 = vector.broadcast %72 : vector<1x256xf32> to vector<8x256xf32>
    %74 = arith.mulf %71, %73 : vector<8x256xf32>
    %75 = tpu.concatenate %46, %50, %54, %58, %41, %62, %66, %70, %74 in 0 : vector<8x256xf32>, vector<8x256xf32>, vector<8x256xf32>, vector<8x256xf32>, vector<8x256xf32>, vector<8x256xf32>, vector<8x256xf32>, vector<8x256xf32>, vector<8x256xf32> -> vector<72x256xf32>
    %cst_42 = arith.constant dense<0.000000e+00> : vector<8x256xf32>
    %76 = tpu.matmul %42, %75, %cst_42 {dimension_numbers = #tpu.dot_dimension_numbers<[1], [0], [0], [1], [0, 0, 1, 1], [], []>} : vector<8x72xf32>, vector<72x256xf32>, vector<8x256xf32> -> vector<8x256xf32>
    %c0_43 = arith.constant 0 : index
    %c0_44 = arith.constant 0 : index
    %77 = vector.load %arg5[%c0_43, %c0_44] : memref<8x1xf32, #tpu.memory_space<vmem>>, vector<8x1xf32>
    %78 = vector.broadcast %77 : vector<8x1xf32> to vector<8x256xf32>
    %79 = arith.addf %76, %78 : vector<8x256xf32>
    %c0_45 = arith.constant 0 : index
    %c0_46 = arith.constant 0 : index
    %c0_47 = arith.constant 0 : index
    %80 = vector.load %arg7[%c0_45, %c0_46, %c0_47] : memref<1x8x256xf32, #tpu.memory_space<vmem>>, vector<1x8x256xf32>
    %81 = vector.shape_cast %80 : vector<1x8x256xf32> to vector<8x256xf32>
    %82 = vector.shape_cast %79 : vector<8x256xf32> to vector<1x8x256xf32>
    tpu.vector_store %arg7[%c0_45, %c0_46, %c0_47], %82 {strides = array<i32>} : memref<1x8x256xf32, #tpu.memory_space<vmem>>, vector<1x8x256xf32>,
    return
  }
  func.func @transform_0(%arg0: i32) -> (i32, i32, i32) {
    %c0_i32 = arith.constant 0 : i32
    %c0_i32_0 = arith.constant 0 : i32
    %c0_i32_1 = arith.constant 0 : i32
    return %arg0, %c0_i32, %c0_i32_0 : i32, i32, i32
  }
  func.func @transform_1(%arg0: i32) -> (i32, i32) {
    %c0_i32 = arith.constant 0 : i32
    %c0_i32_0 = arith.constant 0 : i32
    %c0_i32_1 = arith.constant 0 : i32
    return %c0_i32, %c0_i32_0 : i32, i32
  }
  func.func @transform_2(%arg0: i32) -> (i32, i32) {
    %c0_i32 = arith.constant 0 : i32
    %c0_i32_0 = arith.constant 0 : i32
    %c0_i32_1 = arith.constant 0 : i32
    return %c0_i32, %c0_i32_0 : i32, i32
  }
  func.func @transform_3(%arg0: i32) -> (i32, i32) {
    %c0_i32 = arith.constant 0 : i32
    %c0_i32_0 = arith.constant 0 : i32
    %c0_i32_1 = arith.constant 0 : i32
    return %c0_i32, %c0_i32_0 : i32, i32
  }
  func.func @transform_4(%arg0: i32) -> (i32, i32) {
    %c0_i32 = arith.constant 0 : i32
    %c0_i32_0 = arith.constant 0 : i32
    %c0_i32_1 = arith.constant 0 : i32
    return %c0_i32, %c0_i32_0 : i32, i32
  }
  func.func @transform_5(%arg0: i32) -> (i32, i32) {
    %c0_i32 = arith.constant 0 : i32
    %c0_i32_0 = arith.constant 0 : i32
    %c0_i32_1 = arith.constant 0 : i32
    return %c0_i32, %c0_i32_0 : i32, i32
  }
  func.func @transform_6(%arg0: i32) -> (i32, i32, i32) {
    %c0_i32 = arith.constant 0 : i32
    %c0_i32_0 = arith.constant 0 : i32
    %c0_i32_1 = arith.constant 0 : i32
    return %arg0, %c0_i32, %c0_i32_0 : i32, i32, i32
  }
}

</mosaic_0001>

<llo_original>
// kernel: pre_solu_forward.1
$region0: #{pre_solu_forward.1}
  #allocation0 [shape = 'u32[]', space=smem, size = 0x4, offset = 0x4, fixed_abs, tag = 'smem constant byte address 0x4 - core index']
  #allocation1 [shape = 'u32[144,128]{1,0:T(1,128)}', space=vmem, size = 0x12000, scoped, tag = 'internal scratch']
  %s0 = inlined_call_operand.vmem [shape: f32[2,8,256], index: 0, kind: input, shape index: {}]
  %s1 = inlined_call_operand.vmem [shape: f32[8,72], index: 1, kind: input, shape index: {}]
  %s2 = inlined_call_operand.vmem [shape: f32[8,1], index: 2, kind: input, shape index: {}]
  %s3 = inlined_call_operand.vmem [shape: f32[8,72], index: 3, kind: input, shape index: {}]
  %s4 = inlined_call_operand.vmem [shape: f32[8,1], index: 4, kind: input, shape index: {}]
  %s5 = inlined_call_operand.vmem [shape: f32[9,256], index: 5, kind: input, shape index: {}]
  %s6 = inlined_call_operand.vmem [shape: f32[2,8,256], index: 6, kind: output, shape index: {}]
  %s7 = sld [smem:[#allocation0]]
  $region57: #{pre_solu_forward.1} parent=0
    _
  %s9 = ssub.s32 1, %s7
  %s10 = scalar_select 0, %s9, %s7
  loop: start=0, step=1, limit=4
  $region2: #{pre_solu_forward.1} parent=0 // loop_pre_header
    _
  $region3: #{pre_solu_forward.1} parent=0 // loop_header
    %s12 = sphi 0, %s16
    %p13 = scmp.ge.s32.totalorder %s12, 4
    %s22 = sphi 0, %s24
    %s25 = sphi 0, %s22
    %s26 = sphi 0, %s25
    %s42 = sphi 0, %s26
    %s46 = sphi 0, %s46
    %s48 = sphi 0, %s46
    %s49 = sphi 0, %s48
    %s63 = sphi 0, %s49
    %s67 = sphi 0, %s67
    %s69 = sphi 0, %s67
    %s70 = sphi 0, %s69
    %s84 = sphi 0, %s70
    %s88 = sphi 0, %s88
    %s90 = sphi 0, %s88
    %s91 = sphi 0, %s90
    %s105 = sphi 0, %s91
    %s109 = sphi 0, %s109
    %s111 = sphi 0, %s109
    %s112 = sphi 0, %s111
    %s126 = sphi 0, %s112
    %s130 = sphi 0, %s130
    %s132 = sphi 0, %s130
    %s133 = sphi 0, %s132
    %s147 = sphi 0, %s133
    %s153 = sphi 0, %s155
    %s156 = sphi 0, %s153
    %s157 = sphi 0, %s156
    %s173 = sphi 0, %s157
  $region4: #{pre_solu_forward.1} parent=0 // loop_header_branch
    %15 = sbr.rel (%p13) target = $region8
  $region5: #{pre_solu_forward.1} parent=0 // loop_body
    %s17 = ssub.s32 %s12, 1
    %s18 = ssub.s32 %s12, 2
    %s19 = sadd.s32 %s12, 1
    %s20 = ssub.s32 %s12, %s19
    %p21 = scmp.eq.s32.totalorder %s20, 0
    %s23 = sadd.s32 %s22, 1
    %s24 = scalar_select %p21, %s22, %s23
    %p27 = pneg %p21
    %p28 = scmp.eq.s32.totalorder %s12, 1
    %p29 = por %p27, %p28
    %p30 = scmp.ne.s32.totalorder %s22, %s25
    %p31 = scmp.eq.s32.totalorder %s12, 0
    %p32 = por %p30, %p31
    %p33 = scmp.ne.s32.totalorder %s22, %s25
    %p34 = scmp.eq.s32.totalorder %s17, 1
    %p35 = por %p33, %p34
    %p36 = scmp.ne.s32.totalorder %s25, %s26
    %p37 = scmp.eq.s32.totalorder %s17, 0
    %p38 = por %p36, %p37
    %p39 = scmp.ne.s32.totalorder %s25, %s26
    %p40 = scmp.eq.s32.totalorder %s18, 1
    %p41 = por %p39, %p40
    %p43 = scmp.ne.s32.totalorder %s26, %s42
    %p44 = scmp.eq.s32.totalorder %s18, 0
    %p45 = por %p43, %p44
    %s47 = sadd.s32 %s46, 1
    %p50 = scmp.eq.s32.totalorder %s12, 1
    %p51 = scmp.ne.s32.totalorder %s46, %s48
    %p52 = scmp.eq.s32.totalorder %s12, 0
    %p53 = por %p51, %p52
    %p54 = scmp.ne.s32.totalorder %s46, %s48
    %p55 = scmp.eq.s32.totalorder %s17, 1
    %p56 = por %p54, %p55
    %p57 = scmp.ne.s32.totalorder %s48, %s49
    %p58 = scmp.eq.s32.totalorder %s17, 0
    %p59 = por %p57, %p58
    %p60 = scmp.ne.s32.totalorder %s48, %s49
    %p61 = scmp.eq.s32.totalorder %s18, 1
    %p62 = por %p60, %p61
    %p64 = scmp.ne.s32.totalorder %s49, %s63
    %p65 = scmp.eq.s32.totalorder %s18, 0
    %p66 = por %p64, %p65
    %s68 = sadd.s32 %s67, 1
    %p71 = scmp.eq.s32.totalorder %s12, 1
    %p72 = scmp.ne.s32.totalorder %s67, %s69
    %p73 = scmp.eq.s32.totalorder %s12, 0
    %p74 = por %p72, %p73
    %p75 = scmp.ne.s32.totalorder %s67, %s69
    %p76 = scmp.eq.s32.totalorder %s17, 1
    %p77 = por %p75, %p76
    %p78 = scmp.ne.s32.totalorder %s69, %s70
    %p79 = scmp.eq.s32.totalorder %s17, 0
    %p80 = por %p78, %p79
    %p81 = scmp.ne.s32.totalorder %s69, %s70
    %p82 = scmp.eq.s32.totalorder %s18, 1
    %p83 = por %p81, %p82
    %p85 = scmp.ne.s32.totalorder %s70, %s84
    %p86 = scmp.eq.s32.totalorder %s18, 0
    %p87 = por %p85, %p86
    %s89 = sadd.s32 %s88, 1
    %p92 = scmp.eq.s32.totalorder %s12, 1
    %p93 = scmp.ne.s32.totalorder %s88, %s90
    %p94 = scmp.eq.s32.totalorder %s12, 0
    %p95 = por %p93, %p94
    %p96 = scmp.ne.s32.totalorder %s88, %s90
    %p97 = scmp.eq.s32.totalorder %s17, 1
    %p98 = por %p96, %p97
    %p99 = scmp.ne.s32.totalorder %s90, %s91
    %p100 = scmp.eq.s32.totalorder %s17, 0
    %p101 = por %p99, %p100
    %p102 = scmp.ne.s32.totalorder %s90, %s91
    %p103 = scmp.eq.s32.totalorder %s18, 1
    %p104 = por %p102, %p103
    %p106 = scmp.ne.s32.totalorder %s91, %s105
    %p107 = scmp.eq.s32.totalorder %s18, 0
    %p108 = por %p106, %p107
    %s110 = sadd.s32 %s109, 1
    %p113 = scmp.eq.s32.totalorder %s12, 1
    %p114 = scmp.ne.s32.totalorder %s109, %s111
    %p115 = scmp.eq.s32.totalorder %s12, 0
    %p116 = por %p114, %p115
    %p117 = scmp.ne.s32.totalorder %s109, %s111
    %p118 = scmp.eq.s32.totalorder %s17, 1
    %p119 = por %p117, %p118
    %p120 = scmp.ne.s32.totalorder %s111, %s112
    %p121 = scmp.eq.s32.totalorder %s17, 0
    %p122 = por %p120, %p121
    %p123 = scmp.ne.s32.totalorder %s111, %s112
    %p124 = scmp.eq.s32.totalorder %s18, 1
    %p125 = por %p123, %p124
    %p127 = scmp.ne.s32.totalorder %s112, %s126
    %p128 = scmp.eq.s32.totalorder %s18, 0
    %p129 = por %p127, %p128
    %s131 = sadd.s32 %s130, 1
    %p134 = scmp.eq.s32.totalorder %s12, 1
    %p135 = scmp.ne.s32.totalorder %s130, %s132
    %p136 = scmp.eq.s32.totalorder %s12, 0
    %p137 = por %p135, %p136
    %p138 = scmp.ne.s32.totalorder %s130, %s132
    %p139 = scmp.eq.s32.totalorder %s17, 1
    %p140 = por %p138, %p139
    %p141 = scmp.ne.s32.totalorder %s132, %s133
    %p142 = scmp.eq.s32.totalorder %s17, 0
    %p143 = por %p141, %p142
    %p144 = scmp.ne.s32.totalorder %s132, %s133
    %p145 = scmp.eq.s32.totalorder %s18, 1
    %p146 = por %p144, %p145
    %p148 = scmp.ne.s32.totalorder %s133, %s147
    %p149 = scmp.eq.s32.totalorder %s18, 0
    %p150 = por %p148, %p149
    %s151 = ssub.s32 %s12, %s19
    %p152 = scmp.eq.s32.totalorder %s151, 0
    %s154 = sadd.s32 %s153, 1
    %s155 = scalar_select %p152, %s153, %s154
    %p158 = pneg %p152
    %p159 = scmp.eq.s32.totalorder %s12, 1
    %p160 = por %p158, %p159
    %p161 = scmp.ne.s32.totalorder %s153, %s156
    %p162 = scmp.eq.s32.totalorder %s12, 0
    %p163 = por %p161, %p162
    %p164 = scmp.ne.s32.totalorder %s153, %s156
    %p165 = scmp.eq.s32.totalorder %s17, 1
    %p166 = por %p164, %p165
    %p167 = scmp.ne.s32.totalorder %s156, %s157
    %p168 = scmp.eq.s32.totalorder %s17, 0
    %p169 = por %p167, %p168
    %p170 = scmp.ne.s32.totalorder %s156, %s157
    %p171 = scmp.eq.s32.totalorder %s18, 1
    %p172 = por %p170, %p171
    %p174 = scmp.ne.s32.totalorder %s157, %s173
    %p175 = scmp.eq.s32.totalorder %s18, 0
    %p176 = por %p174, %p175
    %p177 = scmp.le.s32.totalorder 1, %s12
    %p178 = scmp.lt.s32.totalorder %s12, 3
    %p179 = pnand %p177, %p178
    %p180 = pneg %p179
    // Predicated region
    $region9: #{pre_solu_forward.1} parent=5 // pred_check
      _
    $region10: #{pre_solu_forward.1} parent=5 // pred_check_branch
      %182 = sbr.rel (%p179) target = $region12
    $region11: #{pre_solu_forward.1} parent=5 // pred_region
      %s183 = ssub.s32 %s12, 1
      // Predicated region
      $region13: #{pre_solu_forward.1} parent=11 // pred_check
        %p184 = pneg %p59
      $region14: #{pre_solu_forward.1} parent=11 // pred_check_branch
        %186 = sbr.rel (%p184) target = $region16
      $region15: #{pre_solu_forward.1} parent=11 // pred_region
        _
      $region16: #{pre_solu_forward.1} parent=11 // pred_fallthru
        _
      // Predicated region
      $region17: #{pre_solu_forward.1} parent=11 // pred_check
        %p187 = pneg %p80
      $region18: #{pre_solu_forward.1} parent=11 // pred_check_branch
        %189 = sbr.rel (%p187) target = $region20
      $region19: #{pre_solu_forward.1} parent=11 // pred_region
        _
      $region20: #{pre_solu_forward.1} parent=11 // pred_fallthru
        _
      // Predicated region
      $region21: #{pre_solu_forward.1} parent=11 // pred_check
        %p190 = pneg %p101
      $region22: #{pre_solu_forward.1} parent=11 // pred_check_branch
        %192 = sbr.rel (%p190) target = $region24
      $region23: #{pre_solu_forward.1} parent=11 // pred_region
        _
      $region24: #{pre_solu_forward.1} parent=11 // pred_fallthru
        _
      // Predicated region
      $region25: #{pre_solu_forward.1} parent=11 // pred_check
        %p193 = pneg %p122
      $region26: #{pre_solu_forward.1} parent=11 // pred_check_branch
        %195 = sbr.rel (%p193) target = $region28
      $region27: #{pre_solu_forward.1} parent=11 // pred_region
        _
      $region28: #{pre_solu_forward.1} parent=11 // pred_fallthru
        _
      // Predicated region
      $region29: #{pre_solu_forward.1} parent=11 // pred_check
        %p196 = pneg %p143
      $region30: #{pre_solu_forward.1} parent=11 // pred_check_branch
        %198 = sbr.rel (%p196) target = $region32
      $region31: #{pre_solu_forward.1} parent=11 // pred_region
        _
      $region32: #{pre_solu_forward.1} parent=11 // pred_fallthru
        _
    $region12: #{pre_solu_forward.1} parent=5 // pred_fallthru
      _
    %p199 = scmp.lt.s32.totalorder %s12, 2
    // Predicated region
    $region33: #{pre_solu_forward.1} parent=5 // pred_check
      %p200 = pneg %p199
    $region34: #{pre_solu_forward.1} parent=5 // pred_check_branch
      %202 = sbr.rel (%p200) target = $region36
    $region35: #{pre_solu_forward.1} parent=5 // pred_region
      // Predicated region
      $region37: #{pre_solu_forward.1} parent=35 // pred_check
        %p203 = pneg %p32
      $region38: #{pre_solu_forward.1} parent=35 // pred_check_branch
        %205 = sbr.rel (%p203) target = $region40
      $region39: #{pre_solu_forward.1} parent=35 // pred_region
        %p206 = scmp.lt.s32.totalorder %s12, 1
        %s207 = scalar_select %p206, %s12, 1
        %s208 = smul.addr %s207, 2
        %s209 = smul.addr %s208, 8
        %s210 = scalar_lea.vmem %s0, %s209
      $region40: #{pre_solu_forward.1} parent=35 // pred_fallthru
        _
    $region36: #{pre_solu_forward.1} parent=5 // pred_fallthru
      _
    %p211 = scmp.le.s32.totalorder 1, %s12
    %p212 = scmp.lt.s32.totalorder %s12, 3
    %p213 = pnand %p211, %p212
    %p214 = pneg %p213
    // Predicated region
    $region41: #{pre_solu_forward.1} parent=5 // pred_check
      _
    $region42: #{pre_solu_forward.1} parent=5 // pred_check_branch
      %216 = sbr.rel (%p213) target = $region44
    $region43: #{pre_solu_forward.1} parent=5 // pred_region
      %s217 = ssub.s32 %s12, 1
      %p218 = scmp.lt.s32.totalorder %s17, 1
      %s219 = scalar_select %p218, %s17, 1
      %s220 = smul.addr %s219, 2
      %s221 = smul.addr %s220, 8
      %s222 = scalar_lea.vmem %s0, %s221
      %p223 = pneg %p38
      %p224 = pneg %p35
      %p225 = pneg %p59
      %p226 = pneg %p56
      %p227 = pneg %p80
      %p228 = pneg %p77
      %p229 = pneg %p101
      %p230 = pneg %p98
      %p231 = pneg %p122
      %p232 = pneg %p119
      %p233 = pneg %p143
      %p234 = pneg %p140
      %p235 = pneg %p169
      %p236 = pneg %p166
      %p237 = scmp.lt.s32.totalorder %s17, 1
      %s238 = scalar_select %p237, %s17, 1
      %s239 = smul.addr %s238, 2
      %s240 = smul.addr %s239, 8
      %s241 = scalar_lea.vmem %s6, %s240
      %p242 = scmp.lt.s32.totalorder %s17, 1
      %s243 = scalar_select %p242, %s17, 1
      %s244 = smul.addr %s243, 2
      %s245 = smul.addr %s244, 8
      %s246 = scalar_lea.vmem %s0, %s245
      %p247 = scmp.lt.s32.totalorder %s17, 1
      %s248 = scalar_select %p247, %s17, 1
      %s249 = smul.addr %s248, 2
      %s250 = smul.addr %s249, 8
      %s251 = scalar_lea.vmem %s6, %s250
      %v252 = vld [vmem:[%s1] sm:$0xff]
      %v253 = vld [vmem:[%s246] sm:$0xff]
      %v254 = vld [vmem:[%s246 + $0x8] sm:$0xff]
      %255 = vrot.lane.b32.xlu0 %v253, 17
      %v256 = vpop.permute.xlu0 %255
      %257 = vrot.lane.b32.xlu0 %v254, 17
      %v258 = vpop.permute.xlu0 %257
      %v259 = vlaneseq
      %v260 = vand.u32 %v259, 127
      %vm261 = vcmp.lt.s32.totalorder %v260, 17
      %v262 = vsel %vm261, %v256, %v258
      %v263 = vsel %vm261, %v258, %v256
      %v264 = vld [vmem:[%s5] ss:$8 sm:$0x3]
      %v266 = vlaneseq
      %v267 = vshrl.u32 %v266, 7
      %v268 = vsub.s32 0, %v267
      %v269 = vrot.slane %v264, %v268
      %v270 = vlaneseq
      %v271 = vshrl.u32 %v270, 7
      %v272 = vsub.s32 1, %v271
      %v273 = vrot.slane %v264, %v272
      %v276 = vmul.f32 %v263, %v269
      %v277 = vmul.f32 %v262, %v273
      %278 = vrot.lane.b32.xlu0 %v253, 16
      %v279 = vpop.permute.xlu0 %278
      %280 = vrot.lane.b32.xlu0 %v254, 16
      %v281 = vpop.permute.xlu0 %280
      %vm282 = vcmp.lt.s32.totalorder %v260, 16
      %v283 = vsel %vm282, %v279, %v281
      %v284 = vsel %vm282, %v281, %v279
      %s285 = scalar_lea.vmem %s5, 1
      %v286 = vld [vmem:[%s285] ss:$8 sm:$0x3]
      %v288 = vlaneseq
      %v289 = vshrl.u32 %v288, 7
      %v290 = vsub.s32 0, %v289
      %v291 = vrot.slane %v286, %v290
      %v292 = vlaneseq
      %v293 = vshrl.u32 %v292, 7
      %v294 = vsub.s32 1, %v293
      %v295 = vrot.slane %v286, %v294
      %v298 = vmul.f32 %v284, %v291
      %v299 = vmul.f32 %v283, %v295
      %300 = vrot.lane.b32.xlu0 %v253, 15
      %v301 = vpop.permute.xlu0 %300
      %302 = vrot.lane.b32.xlu0 %v254, 15
      %v303 = vpop.permute.xlu0 %302
      %vm304 = vcmp.lt.s32.totalorder %v260, 15
      %v305 = vsel %vm304, %v301, %v303
      %v306 = vsel %vm304, %v303, %v301
      %s307 = scalar_lea.vmem %s5, 2
      %v308 = vld [vmem:[%s307] ss:$8 sm:$0x3]
      %v310 = vlaneseq
      %v311 = vshrl.u32 %v310, 7
      %v312 = vsub.s32 0, %v311
      %v313 = vrot.slane %v308, %v312
      %v314 = vlaneseq
      %v315 = vshrl.u32 %v314, 7
      %v316 = vsub.s32 1, %v315
      %v317 = vrot.slane %v308, %v316
      %v320 = vmul.f32 %v306, %v313
      %v321 = vmul.f32 %v305, %v317
      %322 = vrot.lane.b32.xlu0 %v253, 1
      %v323 = vpop.permute.xlu0 %322
      %324 = vrot.lane.b32.xlu0 %v254, 1
      %v325 = vpop.permute.xlu0 %324
      %vm326 = vcmp.lt.s32.totalorder %v260, 1
      %v327 = vsel %vm326, %v323, %v325
      %v328 = vsel %vm326, %v325, %v323
      %s329 = scalar_lea.vmem %s5, 3
      %v330 = vld [vmem:[%s329] ss:$8 sm:$0x3]
      %v332 = vlaneseq
      %v333 = vshrl.u32 %v332, 7
      %v334 = vsub.s32 0, %v333
      %v335 = vrot.slane %v330, %v334
      %v336 = vlaneseq
      %v337 = vshrl.u32 %v336, 7
      %v338 = vsub.s32 1, %v337
      %v339 = vrot.slane %v330, %v338
      %v342 = vmul.f32 %v328, %v335
      %v343 = vmul.f32 %v327, %v339
      %344 = vrot.lane.b32.xlu0 %v253, 127
      %v345 = vpop.permute.xlu0 %344
      %346 = vrot.lane.b32.xlu0 %v254, 127
      %v347 = vpop.permute.xlu0 %346
      %vm348 = vcmp.lt.s32.totalorder %v260, 127
      %v349 = vsel %vm348, %v345, %v347
      %v350 = vsel %vm348, %v347, %v345
      %s351 = scalar_lea.vmem %s5, 5
      %v352 = vld [vmem:[%s351] ss:$8 sm:$0x3]
      %v354 = vlaneseq
      %v355 = vshrl.u32 %v354, 7
      %v356 = vsub.s32 0, %v355
      %v357 = vrot.slane %v352, %v356
      %v358 = vlaneseq
      %v359 = vshrl.u32 %v358, 7
      %v360 = vsub.s32 1, %v359
      %v361 = vrot.slane %v352, %v360
      %v364 = vmul.f32 %v349, %v357
      %v365 = vmul.f32 %v350, %v361
      %366 = vrot.lane.b32.xlu0 %v253, 113
      %v367 = vpop.permute.xlu0 %366
      %368 = vrot.lane.b32.xlu0 %v254, 113
      %v369 = vpop.permute.xlu0 %368
      %vm370 = vcmp.lt.s32.totalorder %v260, 113
      %v371 = vsel %vm370, %v367, %v369
      %v372 = vsel %vm370, %v369, %v367
      %s373 = scalar_lea.vmem %s5, 6
      %v374 = vld [vmem:[%s373] ss:$8 sm:$0x3]
      %v376 = vlaneseq
      %v377 = vshrl.u32 %v376, 7
      %v378 = vsub.s32 0, %v377
      %v379 = vrot.slane %v374, %v378
      %v380 = vlaneseq
      %v381 = vshrl.u32 %v380, 7
      %v382 = vsub.s32 1, %v381
      %v383 = vrot.slane %v374, %v382
      %v386 = vmul.f32 %v371, %v379
      %v387 = vmul.f32 %v372, %v383
      %388 = vrot.lane.b32.xlu0 %v253, 112
      %v389 = vpop.permute.xlu0 %388
      %390 = vrot.lane.b32.xlu0 %v254, 112
      %v391 = vpop.permute.xlu0 %390
      %vm392 = vcmp.lt.s32.totalorder %v260, 112
      %v393 = vsel %vm392, %v389, %v391
      %v394 = vsel %vm392, %v391, %v389
      %s395 = scalar_lea.vmem %s5, 7
      %v396 = vld [vmem:[%s395] ss:$8 sm:$0x3]
      %v398 = vlaneseq
      %v399 = vshrl.u32 %v398, 7
      %v400 = vsub.s32 0, %v399
      %v401 = vrot.slane %v396, %v400
      %v402 = vlaneseq
      %v403 = vshrl.u32 %v402, 7
      %v404 = vsub.s32 1, %v403
      %v405 = vrot.slane %v396, %v404
      %v408 = vmul.f32 %v393, %v401
      %v409 = vmul.f32 %v394, %v405
      %410 = vrot.lane.b32.xlu0 %v253, 111
      %v411 = vpop.permute.xlu0 %410
      %412 = vrot.lane.b32.xlu0 %v254, 111
      %v413 = vpop.permute.xlu0 %412
      %vm414 = vcmp.lt.s32.totalorder %v260, 111
      %v415 = vsel %vm414, %v411, %v413
      %v416 = vsel %vm414, %v413, %v411
      %s417 = scalar_lea.vmem %s5, 16
      %v418 = vld [vmem:[%s417] ss:$8 sm:$0x3]
      %v420 = vlaneseq
      %v421 = vshrl.u32 %v420, 7
      %v422 = vsub.s32 0, %v421
      %v423 = vrot.slane %v418, %v422
      %v424 = vlaneseq
      %v425 = vshrl.u32 %v424, 7
      %v426 = vsub.s32 1, %v425
      %v427 = vrot.slane %v418, %v426
      %v430 = vmul.f32 %v415, %v423
      %v431 = vmul.f32 %v416, %v427
      %v432 = vld [vmem:[%s2] sm:$0xff]
      %434 = vset.pattern.permute.xlu0 0
      %435 = vperm.xlu0 %434, %v432
      %v436 = vpop.permute.xlu0 %435
      %vm438 = vcmask 588800
      %v440 = vsel %vm438, %v252, 0
      %442 = vmatprep.subr.mxu0 %v277
      %443 = vmatpush1.msra.mxu0 %v276
      %444 = vmatprep.subr.mxu0 %v299
      %445 = vmatpush1.msra.mxu0 %v298
      %446 = vmatprep.subr.mxu0 %v321
      %447 = vmatpush1.msra.mxu0 %v320
      %448 = vmatprep.subr.mxu0 %v343
      %449 = vmatpush1.msra.mxu0 %v342
      %450 = vmatprep.subr.mxu0 %v254
      %451 = vmatpush1.msra.mxu0 %v253
      %452 = vmatprep.subr.mxu0 %v365
      %453 = vmatpush1.msra.mxu0 %v364
      %454 = vmatprep.subr.mxu0 %v387
      %455 = vmatpush1.msra.mxu0 %v386
      %456 = vmatprep.subr.mxu0 %v409
      %457 = vmatpush1.msra.mxu0 %v408
      %458 = vmatprep.subr.mxu0 %v431
      %459 = vmatpush1.msra.mxu0 %v430
      %460 = vmatprep.subr.mxu0 0.0
      %461 = vmatpush1.msra.mxu0 0.0
      %462 = vmatprep.subr.mxu0 0.0
      %463 = vmatpush1.msra.mxu0 0.0
      %464 = vmatprep.subr.mxu0 0.0
      %465 = vmatpush1.msra.mxu0 0.0
      %466 = vmatprep.subr.mxu0 0.0
      %467 = vmatpush1.msra.mxu0 0.0
      %468 = vmatprep.subr.mxu0 0.0
      %469 = vmatpush1.msra.mxu0 0.0
      %470 = vmatprep.subr.mxu0 0.0
      %471 = vmatpush1.msra.mxu0 0.0
      %472 = vmatprep.subr.mxu0 0.0
      %473 = vmatpush1.msra.mxu0 0.0
      %474 = vmatprep.subr.mxu0 0.0
      %475 = vmatpush1.msra.mxu0 0.0
      %476 = vmatprep.subr.mxu0 0.0
      %477 = vmatpush1.msra.mxu0 0.0
      %478 = vmatprep.subr.mxu0 0.0
      %479 = vmatpush1.msra.mxu0 0.0
      %480 = vmatprep.subr.mxu0 0.0
      %481 = vmatpush1.msra.mxu0 0.0
      %482 = vmatprep.subr.mxu0 0.0
      %483 = vmatpush1.msra.mxu0 0.0
      %484 = vmatprep.subr.mxu0 0.0
      %485 = vmatpush1.msra.mxu0 0.0
      %486 = vmatprep.subr.mxu0 0.0
      %487 = vmatpush1.msra.mxu0 0.0
      %488 = vmatprep.subr.mxu0 0.0
      %489 = vmatpush1.msra.mxu0 0.0
      %490 = vmatprep.subr.mxu0 0.0
      %491 = vmatpush1.msra.mxu0 0.0
      %492 = vmatprep.subr.mxu0 0.0
      %493 = vmatpush1.msra.mxu0 0.0
      %494 = vmatprep.subr.mxu0 0.0
      %495 = vmatpush1.msra.mxu0 0.0
      %496 = vmatprep.subr.mxu0 0.0
      %497 = vmatpush1.msra.mxu0 0.0
      %498 = vmatprep.subr.mxu0 0.0
      %499 = vmatpush1.msra.mxu0 0.0
      %500 = vmatprep.subr.mxu0 0.0
      %501 = vmatpush1.msra.mxu0 0.0
      %502 = vmatprep.subr.mxu0 0.0
      %503 = vmatpush1.msra.mxu0 0.0
      %504 = vmatprep.subr.mxu0 0.0
      %505 = vmatpush1.msra.mxu0 0.0
      %506 = vmatprep.mubr.f32.mxu0 0.0
      %507 = vmatmul.mubr.f32.gmra.mrb[0].mxu0 %v440
      %v508 = vpop.f32.mrb[0].mxu0
      %v509 = vadd.f32 %v436, %v508
      %v510 = vpop.f32.mrb[0].mxu0
      %v511 = vadd.f32 %v436, %v510
      %512 = vdwg.mxu0
      %v513 = vmax.f32 %v509, 0.0
      %v514 = vmax.f32 %v511, 0.0
      %v515 = vld [vmem:[%s3] sm:$0xff]
      %516 = vrot.lane.b32.xlu0 %v513, 17
      %v517 = vpop.permute.xlu0 %516
      %518 = vrot.lane.b32.xlu0 %v514, 17
      %v519 = vpop.permute.xlu0 %518
      %v520 = vsel %vm261, %v517, %v519
      %v521 = vsel %vm261, %v519, %v517
      %v522 = vmul.f32 %v521, %v269
      %v523 = vmul.f32 %v520, %v273
      %524 = vrot.lane.b32.xlu0 %v513, 16
      %v525 = vpop.permute.xlu0 %524
      %526 = vrot.lane.b32.xlu0 %v514, 16
      %v527 = vpop.permute.xlu0 %526
      %v528 = vsel %vm282, %v525, %v527
      %v529 = vsel %vm282, %v527, %v525
      %v530 = vmul.f32 %v529, %v291
      %v531 = vmul.f32 %v528, %v295
      %532 = vrot.lane.b32.xlu0 %v513, 15
      %v533 = vpop.permute.xlu0 %532
      %534 = vrot.lane.b32.xlu0 %v514, 15
      %v535 = vpop.permute.xlu0 %534
      %v536 = vsel %vm304, %v533, %v535
      %v537 = vsel %vm304, %v535, %v533
      %v538 = vmul.f32 %v537, %v313
      %v539 = vmul.f32 %v536, %v317
      %540 = vrot.lane.b32.xlu0 %v513, 1
      %v541 = vpop.permute.xlu0 %540
      %542 = vrot.lane.b32.xlu0 %v514, 1
      %v543 = vpop.permute.xlu0 %542
      %v544 = vsel %vm326, %v541, %v543
      %v545 = vsel %vm326, %v543, %v541
      %v546 = vmul.f32 %v545, %v335
      %v547 = vmul.f32 %v544, %v339
      %548 = vrot.lane.b32.xlu0 %v513, 127
      %v549 = vpop.permute.xlu0 %548
      %550 = vrot.lane.b32.xlu0 %v514, 127
      %v551 = vpop.permute.xlu0 %550
      %v552 = vsel %vm348, %v549, %v551
      %v553 = vsel %vm348, %v551, %v549
      %v554 = vmul.f32 %v552, %v357
      %v555 = vmul.f32 %v553, %v361
      %556 = vrot.lane.b32.xlu0 %v513, 113
      %v557 = vpop.permute.xlu0 %556
      %558 = vrot.lane.b32.xlu0 %v514, 113
      %v559 = vpop.permute.xlu0 %558
      %v560 = vsel %vm370, %v557, %v559
      %v561 = vsel %vm370, %v559, %v557
      %v562 = vmul.f32 %v560, %v379
      %v563 = vmul.f32 %v561, %v383
      %564 = vrot.lane.b32.xlu0 %v513, 112
      %v565 = vpop.permute.xlu0 %564
      %566 = vrot.lane.b32.xlu0 %v514, 112
      %v567 = vpop.permute.xlu0 %566
      %v568 = vsel %vm392, %v565, %v567
      %v569 = vsel %vm392, %v567, %v565
      %v570 = vmul.f32 %v568, %v401
      %v571 = vmul.f32 %v569, %v405
      %572 = vrot.lane.b32.xlu0 %v513, 111
      %v573 = vpop.permute.xlu0 %572
      %574 = vrot.lane.b32.xlu0 %v514, 111
      %v575 = vpop.permute.xlu0 %574
      %v576 = vsel %vm414, %v573, %v575
      %v577 = vsel %vm414, %v575, %v573
      %v578 = vmul.f32 %v576, %v423
      %v579 = vmul.f32 %v577, %v427
      %v580 = vld [vmem:[%s4] sm:$0xff]
      %582 = vset.pattern.permute.xlu0 0
      %583 = vperm.xlu0 %582, %v580
      %v584 = vpop.permute.xlu0 %583
      %v587 = vsel %vm438, %v515, 0
      %589 = vmatprep.subr.mxu0 %v523
      %590 = vmatpush1.msra.mxu0 %v522
      %591 = vmatprep.subr.mxu0 %v531
      %592 = vmatpush1.msra.mxu0 %v530
      %593 = vmatprep.subr.mxu0 %v539
      %594 = vmatpush1.msra.mxu0 %v538
      %595 = vmatprep.subr.mxu0 %v547
      %596 = vmatpush1.msra.mxu0 %v546
      %597 = vmatprep.subr.mxu0 %v514
      %598 = vmatpush1.msra.mxu0 %v513
      %599 = vmatprep.subr.mxu0 %v555
      %600 = vmatpush1.msra.mxu0 %v554
      %601 = vmatprep.subr.mxu0 %v563
      %602 = vmatpush1.msra.mxu0 %v562
      %603 = vmatprep.subr.mxu0 %v571
      %604 = vmatpush1.msra.mxu0 %v570
      %605 = vmatprep.subr.mxu0 %v579
      %606 = vmatpush1.msra.mxu0 %v578
      %607 = vmatprep.subr.mxu0 0.0
      %608 = vmatpush1.msra.mxu0 0.0
      %609 = vmatprep.subr.mxu0 0.0
      %610 = vmatpush1.msra.mxu0 0.0
      %611 = vmatprep.subr.mxu0 0.0
      %612 = vmatpush1.msra.mxu0 0.0
      %613 = vmatprep.subr.mxu0 0.0
      %614 = vmatpush1.msra.mxu0 0.0
      %615 = vmatprep.subr.mxu0 0.0
      %616 = vmatpush1.msra.mxu0 0.0
      %617 = vmatprep.subr.mxu0 0.0
      %618 = vmatpush1.msra.mxu0 0.0
      %619 = vmatprep.subr.mxu0 0.0
      %620 = vmatpush1.msra.mxu0 0.0
      %621 = vmatprep.subr.mxu0 0.0
      %622 = vmatpush1.msra.mxu0 0.0
      %623 = vmatprep.subr.mxu0 0.0
      %624 = vmatpush1.msra.mxu0 0.0
      %625 = vmatprep.subr.mxu0 0.0
      %626 = vmatpush1.msra.mxu0 0.0
      %627 = vmatprep.subr.mxu0 0.0
      %628 = vmatpush1.msra.mxu0 0.0
      %629 = vmatprep.subr.mxu0 0.0
      %630 = vmatpush1.msra.mxu0 0.0
      %631 = vmatprep.subr.mxu0 0.0
      %632 = vmatpush1.msra.mxu0 0.0
      %633 = vmatprep.subr.mxu0 0.0
      %634 = vmatpush1.msra.mxu0 0.0
      %635 = vmatprep.subr.mxu0 0.0
      %636 = vmatpush1.msra.mxu0 0.0
      %637 = vmatprep.subr.mxu0 0.0
      %638 = vmatpush1.msra.mxu0 0.0
      %639 = vmatprep.subr.mxu0 0.0
      %640 = vmatpush1.msra.mxu0 0.0
      %641 = vmatprep.subr.mxu0 0.0
      %642 = vmatpush1.msra.mxu0 0.0
      %643 = vmatprep.subr.mxu0 0.0
      %644 = vmatpush1.msra.mxu0 0.0
      %645 = vmatprep.subr.mxu0 0.0
      %646 = vmatpush1.msra.mxu0 0.0
      %647 = vmatprep.subr.mxu0 0.0
      %648 = vmatpush1.msra.mxu0 0.0
      %649 = vmatprep.subr.mxu0 0.0
      %650 = vmatpush1.msra.mxu0 0.0
      %651 = vmatprep.subr.mxu0 0.0
      %652 = vmatpush1.msra.mxu0 0.0
      %653 = vmatprep.mubr.f32.mxu0 0.0
      %654 = vmatmul.mubr.f32.gmra.mrb[0].mxu0 %v587
      %v655 = vpop.f32.mrb[0].mxu0
      %v656 = vadd.f32 %v584, %v655
      %v657 = vpop.f32.mrb[0].mxu0
      %v658 = vadd.f32 %v584, %v657
      %659 = vdwg.mxu0
      %660 = vst [vmem:[%s251] sm:$0xff] %v656
      %661 = vst [vmem:[%s251 + $0x8] sm:$0xff] %v658
      %p662 = scmp.lt.s32.totalorder %s17, 1
      %s663 = scalar_select %p662, %s17, 1
      %s664 = smul.addr %s663, 2
      %s665 = smul.addr %s664, 8
      %s666 = scalar_lea.vmem %s6, %s665
      // Predicated region
      $region45: #{pre_solu_forward.1} parent=43 // pred_check
        %p667 = pneg %p166
      $region46: #{pre_solu_forward.1} parent=43 // pred_check_branch
        %669 = sbr.rel (%p667) target = $region48
      $region47: #{pre_solu_forward.1} parent=43 // pred_region
        _
      $region48: #{pre_solu_forward.1} parent=43 // pred_fallthru
        _
    $region44: #{pre_solu_forward.1} parent=5 // pred_fallthru
      _
    %p670 = scmp.le.s32.totalorder 2, %s12
    // Predicated region
    $region49: #{pre_solu_forward.1} parent=5 // pred_check
      %p671 = pneg %p670
    $region50: #{pre_solu_forward.1} parent=5 // pred_check_branch
      %673 = sbr.rel (%p671) target = $region52
    $region51: #{pre_solu_forward.1} parent=5 // pred_region
      %s674 = ssub.s32 %s12, 2
      // Predicated region
      $region53: #{pre_solu_forward.1} parent=51 // pred_check
        %p675 = pneg %p172
      $region54: #{pre_solu_forward.1} parent=51 // pred_check_branch
        %677 = sbr.rel (%p675) target = $region56
      $region55: #{pre_solu_forward.1} parent=51 // pred_region
        %p678 = scmp.lt.s32.totalorder %s18, 1
        %s679 = scalar_select %p678, %s18, 1
        %s680 = smul.addr %s679, 2
        %s681 = smul.addr %s680, 8
        %s682 = scalar_lea.vmem %s6, %s681
      $region56: #{pre_solu_forward.1} parent=51 // pred_fallthru
        _
    $region52: #{pre_solu_forward.1} parent=5 // pred_fallthru
      _
  $region6: #{pre_solu_forward.1} parent=0 // loop_footer
    %s16 = sadd.s32 1, %s12
  $region7: #{pre_solu_forward.1} parent=0 // loop_footer_branch
    %11 = sbr.rel target = $region3
  $region8: #{pre_solu_forward.1} parent=0 // loop_exit
    _

</llo_original>
